<compile_context>
chip_gen: v7x
topology: tpu7x:2x2x1
jax: 0.10.0
libtpu: 0.0.40
codegen_flags: <defaults>
</compile_context>

<pallas_src>
import functools

import jax
import jax.numpy as jnp
from jax.experimental import pallas as pl
from jax.experimental.pallas import tpu as pltpu

LN_EPS = 1e-5
LANE = 128


def _round_up(x, m):
    return (x + m - 1) // m * m


def _layernorm(h, gamma, beta):
    # PyTorch nn.LayerNorm: biased variance over the last dim, eps=1e-5.
    mean = jnp.mean(h, axis=-1, keepdims=True)
    var = jnp.mean((h - mean) ** 2, axis=-1, keepdims=True)
    return (h - mean) * jax.lax.rsqrt(var + LN_EPS) * gamma + beta


def _fused_scorenet_kernel(x_ref, w1_ref, w2_ref, wout_ref, vec_ref, out_ref,
                           *, d, hdim):
    """Both branches of SparseScoreNet in one kernel body.

    x_ref    : (TB, D)
    w1_ref   : (D, 2H)      = [W1_beta | W1_sigma2]
    w2_ref   : (H, H)       = W2_beta
    wout_ref : (2H, OUTPAD) = block-diag(W3_beta (H,D), W2_sigma2 (H,1)), zero padded
    vec_ref  : (8, VW)      packed biases / LN params (see pack_sparse_scorenet_params)
    out_ref  : (TB, OUTPAD) lane-dense output slab
    """
    x = x_ref[...]
    vec = vec_ref[...]
    h2 = 2 * hdim

    # ---- layer 1, both branches fused: x @ [W1_beta | W1_sigma2] ----
    hcat = jnp.dot(x, w1_ref[...], preferred_element_type=jnp.float32)
    hcat = hcat + vec[0:1, :h2]
    hb = hcat[:, :hdim]          # beta branch hidden
    hs = hcat[:, hdim:h2]        # sigma2 branch hidden
    hb = jnp.maximum(_layernorm(hb, vec[1:2, :hdim], vec[2:3, :hdim]), 0.0)
    hs = jnp.maximum(_layernorm(hs, vec[1:2, hdim:h2], vec[2:3, hdim:h2]), 0.0)

    # ---- beta branch layer 2 ----
    hb = jnp.dot(hb, w2_ref[...], preferred_element_type=jnp.float32) + vec[3:4, :hdim]
    hb = jnp.maximum(_layernorm(hb, vec[4:5, :hdim], vec[5:6, :hdim]), 0.0)

    # ---- fused output layer: [hb | hs] @ block-diag(W3_beta, W2_sigma2) ----
    hout = jnp.concatenate([hb, hs], axis=-1)                       # (TB, 2H)
    slab = jnp.dot(hout, wout_ref[...], preferred_element_type=jnp.float32)
    out_pad = slab.shape[-1]
    slab = slab + vec[6:7, :out_pad]                                # packed output biases

    # Softplus only on the sigma2 column (lane index d); beta lanes pass through.
    col = jax.lax.broadcasted_iota(jnp.int32, slab.shape, 1)
    softplus = jnp.maximum(slab, 0.0) + jnp.log(1.0 + jnp.exp(-jnp.abs(slab)))
    out_ref[...] = jnp.where(col == d, softplus, slab).astype(out_ref.dtype)


# ----------------------------------------------------------------------------
# Parameter construction (deterministic, synthetic weights) and packing
# ----------------------------------------------------------------------------

def make_sparse_scorenet_params(key, n_features, hidden_dim):
    """Raw per-layer params. Linear weights are stored pre-transposed (in, out)."""
    def linear(k, din, dout):
        kw, kb = jax.random.split(k)
        bound = 1.0 / (din ** 0.5)
        w = jax.random.uniform(kw, (din, dout), jnp.float32, -bound, bound)
        b = jax.random.uniform(kb, (dout,), jnp.float32, -bound, bound)
        return w, b

    def layer_norm(k, dim):
        kg, kb = jax.random.split(k)
        g = 1.0 + 0.1 * jax.random.normal(kg, (dim,), jnp.float32)
        b = 0.1 * jax.random.normal(kb, (dim,), jnp.float32)
        return g, b

    ks = jax.random.split(key, 8)
    p = {}
    # beta_net
    p["w1b"], p["b1b"] = linear(ks[0], n_features, hidden_dim)
    p["g1b"], p["be1b"] = layer_norm(ks[1], hidden_dim)
    p["w2b"], p["b2b"] = linear(ks[2], hidden_dim, hidden_dim)
    p["g2b"], p["be2b"] = layer_norm(ks[3], hidden_dim)
    p["w3b"], p["b3b"] = linear(ks[4], hidden_dim, n_features)
    # sigma2_net
    p["w1s"], p["b1s"] = linear(ks[5], n_features, hidden_dim)
    p["g1s"], p["be1s"] = layer_norm(ks[6], hidden_dim)
    p["w2s"], p["b2s"] = linear(ks[7], hidden_dim, 1)
    return p


def pack_sparse_scorenet_params(p, n_features, hidden_dim):
    """Pack raw params into the 4 kernel inputs: (W1_cat, W2_beta, W_out, vec)."""
    d, hdim = n_features, hidden_dim
    h2 = 2 * hdim
    out_pad = _round_up(d + 1, LANE)
    vec_w = max(_round_up(h2, LANE), out_pad)

    # Concatenated first-layer weight (one MXU push serves both branches).
    w1_cat = jnp.concatenate([p["w1b"], p["w1s"]], axis=1)            # (D, 2H)

    # Block-diagonal, lane-dense final weight: [hb | hs] @ W_out -> (B, out_pad).
    w_out = jnp.zeros((h2, out_pad), jnp.float32)
    w_out = w_out.at[:hdim, :d].set(p["w3b"])                         # beta columns
    w_out = w_out.at[hdim:, d:d + 1].set(p["w2s"])                    # sigma2 column

    # All small vectors in a single (8, vec_w) tile (1 DMA).
    vec = jnp.zeros((8, vec_w), jnp.float32)
    vec = vec.at[0, :h2].set(jnp.concatenate([p["b1b"], p["b1s"]]))   # layer-1 biases
    vec = vec.at[1, :h2].set(jnp.concatenate([p["g1b"], p["g1s"]]))   # LN1 gamma
    vec = vec.at[2, :h2].set(jnp.concatenate([p["be1b"], p["be1s"]])) # LN1 beta
    vec = vec.at[3, :hdim].set(p["b2b"])                              # beta layer-2 bias
    vec = vec.at[4, :hdim].set(p["g2b"])                              # LN2 gamma
    vec = vec.at[5, :hdim].set(p["be2b"])                             # LN2 beta
    vec = vec.at[6, :d].set(p["b3b"])                                 # beta output bias
    vec = vec.at[6, d].set(p["b2s"][0])                               # sigma2 output bias
    return w1_cat, p["w2b"], w_out, vec


# ----------------------------------------------------------------------------
# Wrapper
# ----------------------------------------------------------------------------

@functools.partial(jax.jit, static_argnames=("n_features", "hidden_dim"))
def sparse_scorenet_forward(x, packed, *, n_features, hidden_dim):
    w1_cat, w2b, w_out, vec = packed
    batch, d = x.shape
    h2 = 2 * hidden_dim
    out_pad = w_out.shape[1]

    # Batch grid axis: sharded across TensorCores on v7x at realistic batch sizes;
    # degenerates to grid=(1,) at the toy batch (harmless everywhere).
    tb = 128 if batch % 128 == 0 else batch
    grid = (batch // tb,)

    kernel = functools.partial(_fused_scorenet_kernel, d=n_features, hdim=hidden_dim)
    slab = pl.pallas_call(
        kernel,
        out_shape=jax.ShapeDtypeStruct((batch, out_pad), jnp.float32),
        grid=grid,
        in_specs=[
            pl.BlockSpec((tb, d), lambda i: (i, 0)),                  # x
            pl.BlockSpec((d, h2), lambda i: (0, 0)),                  # W1_cat
            pl.BlockSpec((hidden_dim, hidden_dim), lambda i: (0, 0)), # W2_beta
            pl.BlockSpec((h2, out_pad), lambda i: (0, 0)),            # W_out (block-diag)
            pl.BlockSpec(vec.shape, lambda i: (0, 0)),                # packed vectors
        ],
        out_specs=pl.BlockSpec((tb, out_pad), lambda i: (i, 0)),
        compiler_params=pltpu.CompilerParams(
            dimension_semantics=("parallel",)),
    )(x, w1_cat, w2b, w_out, vec)

    beta = slab[:, :n_features]
    sigma2 = slab[:, n_features:n_features + 1]
    return beta, sigma2


# ----------------------------------------------------------------------------
# Pure-JAX reference (matches the PyTorch module semantics)
# ----------------------------------------------------------------------------

def _ref_layernorm(v, g, b):
    m = jnp.mean(v, axis=-1, keepdims=True)
    var = jnp.mean((v - m) ** 2, axis=-1, keepdims=True)
    return (v - m) / jnp.sqrt(var + LN_EPS) * g + b


def ref_sparse_scorenet(x, p):
    hb = jnp.maximum(_ref_layernorm(x @ p["w1b"] + p["b1b"], p["g1b"], p["be1b"]), 0.0)
    hb = jnp.maximum(_ref_layernorm(hb @ p["w2b"] + p["b2b"], p["g2b"], p["be2b"]), 0.0)
    beta = hb @ p["w3b"] + p["b3b"]
    hs = jnp.maximum(_ref_layernorm(x @ p["w1s"] + p["b1s"], p["g1s"], p["be1s"]), 0.0)
    sigma2 = jax.nn.softplus(hs @ p["w2s"] + p["b2s"])
    return beta, sigma2


if __name__ == "__main__":
    N_FEATURES = 4
    HIDDEN_DIM = 32
    BATCH = 8

    key = jax.random.PRNGKey(0)
    kx, kp = jax.random.split(key)
    x = jax.random.normal(kx, (BATCH, N_FEATURES), jnp.float32)

    params = make_sparse_scorenet_params(kp, N_FEATURES, HIDDEN_DIM)
    packed = pack_sparse_scorenet_params(params, N_FEATURES, HIDDEN_DIM)

    beta, sigma2 = sparse_scorenet_forward(
        x, packed, n_features=N_FEATURES, hidden_dim=HIDDEN_DIM)
    jax.block_until_ready((beta, sigma2))

    assert beta.shape == (BATCH, N_FEATURES)
    assert sigma2.shape == (BATCH, 1)

    beta_ref, sigma2_ref = ref_sparse_scorenet(x, params)
    assert jnp.allclose(beta, beta_ref, atol=1e-4, rtol=1e-4)
    assert jnp.allclose(sigma2, sigma2_ref, atol=1e-4, rtol=1e-4)
    assert bool(jnp.all(sigma2 > 0.0))  # Softplus output is strictly positive

    print("KERNEL_OK")
</pallas_src>

<mosaic_0001>
module attributes {stable_mosaic.version = 11 : i64} {
  func.func @_fused_scorenet_kernel(%arg0: i32, %arg1: memref<8x4xf32, #tpu.memory_space<vmem>>, %arg2: memref<4x64xf32, #tpu.memory_space<vmem>>, %arg3: memref<32x32xf32, #tpu.memory_space<vmem>>, %arg4: memref<64x128xf32, #tpu.memory_space<vmem>>, %arg5: memref<8x128xf32, #tpu.memory_space<vmem>>, %arg6: memref<8x128xf32, #tpu.memory_space<vmem>>) attributes {dimension_semantics = [#tpu.dimension_semantics<parallel>], iteration_bounds = array<i64: 1>, scalar_prefetch = 0 : i64, scratch_operands = 0 : i64, tpu.core_type = #tpu.core_type<tc>, window_params = [{transform_indices = @transform_0, window_bounds = array<i64: 8, 4>}, {pipeline_mode = #tpu.pipeline_mode<synchronous>, transform_indices = @transform_1, window_bounds = array<i64: 4, 64>}, {pipeline_mode = #tpu.pipeline_mode<synchronous>, transform_indices = @transform_2, window_bounds = array<i64: 32, 32>}, {pipeline_mode = #tpu.pipeline_mode<synchronous>, transform_indices = @transform_3, window_bounds = array<i64: 64, 128>}, {pipeline_mode = #tpu.pipeline_mode<synchronous>, transform_indices = @transform_4, window_bounds = array<i64: 8, 128>}, {transform_indices = @transform_5, window_bounds = array<i64: 8, 128>}]} {
    %c0 = arith.constant 0 : index
    %c0_0 = arith.constant 0 : index
    %0 = vector.load %arg1[%c0, %c0_0] : memref<8x4xf32, #tpu.memory_space<vmem>>, vector<8x4xf32>
    %c0_1 = arith.constant 0 : index
    %c0_2 = arith.constant 0 : index
    %1 = vector.load %arg5[%c0_1, %c0_2] : memref<8x128xf32, #tpu.memory_space<vmem>>, vector<8x128xf32>
    %c0_3 = arith.constant 0 : index
    %c0_4 = arith.constant 0 : index
    %2 = vector.load %arg2[%c0_3, %c0_4] : memref<4x64xf32, #tpu.memory_space<vmem>>, vector<4x64xf32>
    %cst = arith.constant dense<0.000000e+00> : vector<8x64xf32>
    %3 = tpu.matmul %0, %2, %cst {dimension_numbers = #tpu.dot_dimension_numbers<[1], [0], [0], [1], [0, 0, 1, 1], [], []>} : vector<8x4xf32>, vector<4x64xf32>, vector<8x64xf32> -> vector<8x64xf32>
    %4 = vector.extract_strided_slice %1 {offsets = [0, 0], sizes = [1, 64], strides = [1, 1]} : vector<8x128xf32> to vector<1x64xf32>
    %5 = vector.broadcast %4 : vector<1x64xf32> to vector<8x64xf32>
    %6 = arith.addf %3, %5 : vector<8x64xf32>
    %7 = vector.extract_strided_slice %6 {offsets = [0, 0], sizes = [8, 32], strides = [1, 1]} : vector<8x64xf32> to vector<8x32xf32>
    %8 = vector.extract_strided_slice %6 {offsets = [0, 32], sizes = [8, 32], strides = [1, 1]} : vector<8x64xf32> to vector<8x32xf32>
    %9 = vector.extract_strided_slice %1 {offsets = [1, 0], sizes = [1, 32], strides = [1, 1]} : vector<8x128xf32> to vector<1x32xf32>
    %10 = vector.extract_strided_slice %1 {offsets = [2, 0], sizes = [1, 32], strides = [1, 1]} : vector<8x128xf32> to vector<1x32xf32>
    %cst_5 = arith.constant dense<0.000000e+00> : vector<8xf32>
    %11 = vector.multi_reduction <add>, %7, %cst_5 [1] : vector<8x32xf32> to vector<8xf32>
    %12 = vector.shape_cast %11 : vector<8xf32> to vector<8x1xf32>
    %cst_6 = arith.constant 3.200000e+01 : f32
    %13 = vector.broadcast %cst_6 : f32 to vector<8x1xf32>
    %14 = arith.divf %12, %13 : vector<8x1xf32>
    %15 = vector.broadcast %14 : vector<8x1xf32> to vector<8x32xf32>
    %16 = arith.subf %7, %15 : vector<8x32xf32>
    %17 = arith.mulf %16, %16 : vector<8x32xf32>
    %cst_7 = arith.constant dense<0.000000e+00> : vector<8xf32>
    %18 = vector.multi_reduction <add>, %17, %cst_7 [1] : vector<8x32xf32> to vector<8xf32>
    %19 = vector.shape_cast %18 : vector<8xf32> to vector<8x1xf32>
    %cst_8 = arith.constant 3.200000e+01 : f32
    %20 = vector.broadcast %cst_8 : f32 to vector<8x1xf32>
    %21 = arith.divf %19, %20 : vector<8x1xf32>
    %22 = vector.broadcast %14 : vector<8x1xf32> to vector<8x32xf32>
    %23 = arith.subf %7, %22 : vector<8x32xf32>
    %cst_9 = arith.constant 9.99999974E-6 : f32
    %24 = vector.broadcast %cst_9 : f32 to vector<8x1xf32>
    %25 = arith.addf %21, %24 : vector<8x1xf32>
    %26 = math.rsqrt %25 : vector<8x1xf32>
    %27 = vector.broadcast %26 : vector<8x1xf32> to vector<8x32xf32>
    %28 = arith.mulf %23, %27 : vector<8x32xf32>
    %29 = vector.broadcast %9 : vector<1x32xf32> to vector<8x32xf32>
    %30 = arith.mulf %28, %29 : vector<8x32xf32>
    %31 = vector.broadcast %10 : vector<1x32xf32> to vector<8x32xf32>
    %32 = arith.addf %30, %31 : vector<8x32xf32>
    %cst_10 = arith.constant 0.000000e+00 : f32
    %33 = vector.broadcast %cst_10 : f32 to vector<8x32xf32>
    %34 = arith.maximumf %32, %33 : vector<8x32xf32>
    %35 = vector.extract_strided_slice %1 {offsets = [1, 32], sizes = [1, 32], strides = [1, 1]} : vector<8x128xf32> to vector<1x32xf32>
    %36 = vector.extract_strided_slice %1 {offsets = [2, 32], sizes = [1, 32], strides = [1, 1]} : vector<8x128xf32> to vector<1x32xf32>
    %cst_11 = arith.constant dense<0.000000e+00> : vector<8xf32>
    %37 = vector.multi_reduction <add>, %8, %cst_11 [1] : vector<8x32xf32> to vector<8xf32>
    %38 = vector.shape_cast %37 : vector<8xf32> to vector<8x1xf32>
    %cst_12 = arith.constant 3.200000e+01 : f32
    %39 = vector.broadcast %cst_12 : f32 to vector<8x1xf32>
    %40 = arith.divf %38, %39 : vector<8x1xf32>
    %41 = vector.broadcast %40 : vector<8x1xf32> to vector<8x32xf32>
    %42 = arith.subf %8, %41 : vector<8x32xf32>
    %43 = arith.mulf %42, %42 : vector<8x32xf32>
    %cst_13 = arith.constant dense<0.000000e+00> : vector<8xf32>
    %44 = vector.multi_reduction <add>, %43, %cst_13 [1] : vector<8x32xf32> to vector<8xf32>
    %45 = vector.shape_cast %44 : vector<8xf32> to vector<8x1xf32>
    %cst_14 = arith.constant 3.200000e+01 : f32
    %46 = vector.broadcast %cst_14 : f32 to vector<8x1xf32>
    %47 = arith.divf %45, %46 : vector<8x1xf32>
    %48 = vector.broadcast %40 : vector<8x1xf32> to vector<8x32xf32>
    %49 = arith.subf %8, %48 : vector<8x32xf32>
    %cst_15 = arith.constant 9.99999974E-6 : f32
    %50 = vector.broadcast %cst_15 : f32 to vector<8x1xf32>
    %51 = arith.addf %47, %50 : vector<8x1xf32>
    %52 = math.rsqrt %51 : vector<8x1xf32>
    %53 = vector.broadcast %52 : vector<8x1xf32> to vector<8x32xf32>
    %54 = arith.mulf %49, %53 : vector<8x32xf32>
    %55 = vector.broadcast %35 : vector<1x32xf32> to vector<8x32xf32>
    %56 = arith.mulf %54, %55 : vector<8x32xf32>
    %57 = vector.broadcast %36 : vector<1x32xf32> to vector<8x32xf32>
    %58 = arith.addf %56, %57 : vector<8x32xf32>
    %cst_16 = arith.constant 0.000000e+00 : f32
    %59 = vector.broadcast %cst_16 : f32 to vector<8x32xf32>
    %60 = arith.maximumf %58, %59 : vector<8x32xf32>
    %c0_17 = arith.constant 0 : index
    %c0_18 = arith.constant 0 : index
    %61 = vector.load %arg3[%c0_17, %c0_18] : memref<32x32xf32, #tpu.memory_space<vmem>>, vector<32x32xf32>
    %cst_19 = arith.constant dense<0.000000e+00> : vector<8x32xf32>
    %62 = tpu.matmul %34, %61, %cst_19 {dimension_numbers = #tpu.dot_dimension_numbers<[1], [0], [0], [1], [0, 0, 1, 1], [], []>} : vector<8x32xf32>, vector<32x32xf32>, vector<8x32xf32> -> vector<8x32xf32>
    %63 = vector.extract_strided_slice %1 {offsets = [3, 0], sizes = [1, 32], strides = [1, 1]} : vector<8x128xf32> to vector<1x32xf32>
    %64 = vector.broadcast %63 : vector<1x32xf32> to vector<8x32xf32>
    %65 = arith.addf %62, %64 : vector<8x32xf32>
    %66 = vector.extract_strided_slice %1 {offsets = [4, 0], sizes = [1, 32], strides = [1, 1]} : vector<8x128xf32> to vector<1x32xf32>
    %67 = vector.extract_strided_slice %1 {offsets = [5, 0], sizes = [1, 32], strides = [1, 1]} : vector<8x128xf32> to vector<1x32xf32>
    %cst_20 = arith.constant dense<0.000000e+00> : vector<8xf32>
    %68 = vector.multi_reduction <add>, %65, %cst_20 [1] : vector<8x32xf32> to vector<8xf32>
    %69 = vector.shape_cast %68 : vector<8xf32> to vector<8x1xf32>
    %cst_21 = arith.constant 3.200000e+01 : f32
    %70 = vector.broadcast %cst_21 : f32 to vector<8x1xf32>
    %71 = arith.divf %69, %70 : vector<8x1xf32>
    %72 = vector.broadcast %71 : vector<8x1xf32> to vector<8x32xf32>
    %73 = arith.subf %65, %72 : vector<8x32xf32>
    %74 = arith.mulf %73, %73 : vector<8x32xf32>
    %cst_22 = arith.constant dense<0.000000e+00> : vector<8xf32>
    %75 = vector.multi_reduction <add>, %74, %cst_22 [1] : vector<8x32xf32> to vector<8xf32>
    %76 = vector.shape_cast %75 : vector<8xf32> to vector<8x1xf32>
    %cst_23 = arith.constant 3.200000e+01 : f32
    %77 = vector.broadcast %cst_23 : f32 to vector<8x1xf32>
    %78 = arith.divf %76, %77 : vector<8x1xf32>
    %79 = vector.broadcast %71 : vector<8x1xf32> to vector<8x32xf32>
    %80 = arith.subf %65, %79 : vector<8x32xf32>
    %cst_24 = arith.constant 9.99999974E-6 : f32
    %81 = vector.broadcast %cst_24 : f32 to vector<8x1xf32>
    %82 = arith.addf %78, %81 : vector<8x1xf32>
    %83 = math.rsqrt %82 : vector<8x1xf32>
    %84 = vector.broadcast %83 : vector<8x1xf32> to vector<8x32xf32>
    %85 = arith.mulf %80, %84 : vector<8x32xf32>
    %86 = vector.broadcast %66 : vector<1x32xf32> to vector<8x32xf32>
    %87 = arith.mulf %85, %86 : vector<8x32xf32>
    %88 = vector.broadcast %67 : vector<1x32xf32> to vector<8x32xf32>
    %89 = arith.addf %87, %88 : vector<8x32xf32>
    %cst_25 = arith.constant 0.000000e+00 : f32
    %90 = vector.broadcast %cst_25 : f32 to vector<8x32xf32>
    %91 = arith.maximumf %89, %90 : vector<8x32xf32>
    %92 = tpu.concatenate %91, %60 in 1 : vector<8x32xf32>, vector<8x32xf32> -> vector<8x64xf32>
    %c0_26 = arith.constant 0 : index
    %c0_27 = arith.constant 0 : index
    %93 = vector.load %arg4[%c0_26, %c0_27] : memref<64x128xf32, #tpu.memory_space<vmem>>, vector<64x128xf32>
    %cst_28 = arith.constant dense<0.000000e+00> : vector<8x128xf32>
    %94 = tpu.matmul %92, %93, %cst_28 {dimension_numbers = #tpu.dot_dimension_numbers<[1], [0], [0], [1], [0, 0, 1, 1], [], []>} : vector<8x64xf32>, vector<64x128xf32>, vector<8x128xf32> -> vector<8x128xf32>
    %95 = vector.extract_strided_slice %1 {offsets = [6, 0], sizes = [1, 128], strides = [1, 1]} : vector<8x128xf32> to vector<1x128xf32>
    %96 = vector.broadcast %95 : vector<1x128xf32> to vector<8x128xf32>
    %97 = arith.addf %94, %96 : vector<8x128xf32>
    %98 = tpu.iota {dimensions = array<i32: 1>} : vector<8x128xi32>
    %cst_29 = arith.constant 0.000000e+00 : f32
    %99 = vector.broadcast %cst_29 : f32 to vector<8x128xf32>
    %100 = arith.maximumf %97, %99 : vector<8x128xf32>
    %101 = math.absf %97 : vector<8x128xf32>
    %cst_30 = arith.constant 0.000000e+00 : f32
    %102 = vector.broadcast %cst_30 : f32 to vector<8x128xf32>
    %103 = arith.subf %102, %101 : vector<8x128xf32>
    %104 = math.exp %103 : vector<8x128xf32>
    %cst_31 = arith.constant 1.000000e+00 : f32
    %105 = vector.broadcast %cst_31 : f32 to vector<8x128xf32>
    %106 = arith.addf %105, %104 : vector<8x128xf32>
    %107 = math.log %106 : vector<8x128xf32>
    %108 = arith.addf %100, %107 : vector<8x128xf32>
    %c4_i32 = arith.constant 4 : i32
    %109 = vector.broadcast %c4_i32 : i32 to vector<8x128xi32>
    %110 = arith.cmpi eq, %98, %109 : vector<8x128xi32>
    %111 = arith.select %110, %108, %97 : vector<8x128xi1>, vector<8x128xf32>
    %c0_32 = arith.constant 0 : index
    %c0_33 = arith.constant 0 : index
    %112 = vector.load %arg6[%c0_32, %c0_33] : memref<8x128xf32, #tpu.memory_space<vmem>>, vector<8x128xf32>
    tpu.vector_store %arg6[%c0_32, %c0_33], %111 {strides = array<i32>} : memref<8x128xf32, #tpu.memory_space<vmem>>, vector<8x128xf32>,
    return
  }
  func.func @transform_0(%arg0: i32) -> (i32, i32) {
    %c0_i32 = arith.constant 0 : i32
    %c0_i32_0 = arith.constant 0 : i32
    return %arg0, %c0_i32 : i32, i32
  }
  func.func @transform_1(%arg0: i32) -> (i32, i32) {
    %c0_i32 = arith.constant 0 : i32
    %c0_i32_0 = arith.constant 0 : i32
    %c0_i32_1 = arith.constant 0 : i32
    return %c0_i32, %c0_i32_0 : i32, i32
  }
  func.func @transform_2(%arg0: i32) -> (i32, i32) {
    %c0_i32 = arith.constant 0 : i32
    %c0_i32_0 = arith.constant 0 : i32
    %c0_i32_1 = arith.constant 0 : i32
    return %c0_i32, %c0_i32_0 : i32, i32
  }
  func.func @transform_3(%arg0: i32) -> (i32, i32) {
    %c0_i32 = arith.constant 0 : i32
    %c0_i32_0 = arith.constant 0 : i32
    %c0_i32_1 = arith.constant 0 : i32
    return %c0_i32, %c0_i32_0 : i32, i32
  }
  func.func @transform_4(%arg0: i32) -> (i32, i32) {
    %c0_i32 = arith.constant 0 : i32
    %c0_i32_0 = arith.constant 0 : i32
    %c0_i32_1 = arith.constant 0 : i32
    return %c0_i32, %c0_i32_0 : i32, i32
  }
  func.func @transform_5(%arg0: i32) -> (i32, i32) {
    %c0_i32 = arith.constant 0 : i32
    %c0_i32_0 = arith.constant 0 : i32
    return %arg0, %c0_i32 : i32, i32
  }
}

</mosaic_0001>

<llo_original>
// kernel: sparse_scorenet_forward.1
$region0: #{sparse_scorenet_forward.1}
  #allocation0 [shape = 'u32[]', space=smem, size = 0x4, offset = 0x4, fixed_abs, tag = 'smem constant byte address 0x4 - core index']
  #allocation1 [shape = 'u32[144,128]{1,0:T(1,128)}', space=vmem, size = 0x12000, scoped, tag = 'internal scratch']
  %s0 = inlined_call_operand.vmem [shape: f32[8,4], index: 0, kind: input, shape index: {}]
  %s1 = inlined_call_operand.vmem [shape: f32[4,64], index: 1, kind: input, shape index: {}]
  %s2 = inlined_call_operand.hbm [shape: f32[32,32], index: 2, kind: input, shape index: {}]
  %s3 = inlined_call_operand.hbm [shape: f32[64,128], index: 3, kind: input, shape index: {}]
  %s4 = inlined_call_operand.vmem [shape: f32[8,128], index: 4, kind: input, shape index: {}]
  %s5 = inlined_call_operand.vmem [shape: f32[8,128], index: 5, kind: output, shape index: {}]
  %s6 = sld [smem:[#allocation0]]
  $region38: #{sparse_scorenet_forward.1} parent=0
    _
  %s8 = ssub.s32 1, %s6
  %s9 = scalar_select 0, %s8, %s6
  $region1: #{sparse_scorenet_forward.1} parent=0
    #allocation2 [shape = 'u8[16384]{0}', space=vmem, size = 0x4000, scoped, tag = 'input window, operand 2, single buffered']
    #allocation3 [shape = 's32[1]{0}', space=sflag, size = 0x4, scoped, tag = 'scoped memory for sparse_scorenet_forward.1']
    #allocation4 [shape = 'u8[32768]{0}', space=vmem, size = 0x8000, scoped, tag = 'input window, operand 3, single buffered']
    #allocation5 [shape = 's32[1]{0}', space=sflag, size = 0x4, scoped, tag = 'scoped memory for sparse_scorenet_forward.1']
    %10 = vsyncpa [#allocation3], 0
    %11 = vsyncpa [#allocation5], 0
    // Predicated region
    $region2: #{sparse_scorenet_forward.1} parent=1 // pred_check
      _
    $region3: #{sparse_scorenet_forward.1} parent=1 // pred_check_branch
      %13 = sbr.rel (0) target = $region5
    $region4: #{sparse_scorenet_forward.1} parent=1 // pred_region
      _
    $region5: #{sparse_scorenet_forward.1} parent=1 // pred_fallthru
      _
    // Predicated region
    $region6: #{sparse_scorenet_forward.1} parent=1 // pred_check
      _
    $region7: #{sparse_scorenet_forward.1} parent=1 // pred_check_branch
      %15 = sbr.rel (0) target = $region9
    $region8: #{sparse_scorenet_forward.1} parent=1 // pred_region
      _
    $region9: #{sparse_scorenet_forward.1} parent=1 // pred_fallthru
      _
    // Predicated region
    $region10: #{sparse_scorenet_forward.1} parent=1 // pred_check
      _
    $region11: #{sparse_scorenet_forward.1} parent=1 // pred_check_branch
      %17 = sbr.rel (0) target = $region13
    $region12: #{sparse_scorenet_forward.1} parent=1 // pred_region
      %s19 = ssub.s32 512, 512
      %20 = vsyncadd [#allocation3], %s19
      %s21 = sshll.u32 [#allocation2], 4
      %s22 = int_to_ptr.vmem [resolvable:$true] %s21
      %27 = dma.hbm_to_vmem [thread:$0]  %s2, 512, %s22, [#allocation3], 128, 128, 8
    $region13: #{sparse_scorenet_forward.1} parent=1 // pred_fallthru
      _
    // Predicated region
    $region14: #{sparse_scorenet_forward.1} parent=1 // pred_check
      _
    $region15: #{sparse_scorenet_forward.1} parent=1 // pred_check_branch
      %29 = sbr.rel (0) target = $region17
    $region16: #{sparse_scorenet_forward.1} parent=1 // pred_region
      %s31 = ssub.s32 1024, 1024
      %32 = vsyncadd [#allocation5], %s31
      %s33 = sshll.u32 [#allocation4], 4
      %s34 = int_to_ptr.vmem [resolvable:$true] %s33
      %39 = dma.hbm_to_vmem [thread:$0]  %s3, 1024, %s34, [#allocation5], 128, 128, 8
    $region17: #{sparse_scorenet_forward.1} parent=1 // pred_fallthru
      _
    // Predicated region
    $region18: #{sparse_scorenet_forward.1} parent=1 // pred_check
      _
    $region19: #{sparse_scorenet_forward.1} parent=1 // pred_check_branch
      %41 = sbr.rel (0) target = $region21
    $region20: #{sparse_scorenet_forward.1} parent=1 // pred_region
      _
    $region21: #{sparse_scorenet_forward.1} parent=1 // pred_fallthru
      _
    // Predicated region
    $region22: #{sparse_scorenet_forward.1} parent=1 // pred_check
      _
    $region23: #{sparse_scorenet_forward.1} parent=1 // pred_check_branch
      %43 = sbr.rel (0) target = $region25
    $region24: #{sparse_scorenet_forward.1} parent=1 // pred_region
      %44 = dma.done [#allocation3], 512
    $region25: #{sparse_scorenet_forward.1} parent=1 // pred_fallthru
      _
    // Predicated region
    $region26: #{sparse_scorenet_forward.1} parent=1 // pred_check
      _
    $region27: #{sparse_scorenet_forward.1} parent=1 // pred_check_branch
      %46 = sbr.rel (0) target = $region29
    $region28: #{sparse_scorenet_forward.1} parent=1 // pred_region
      %47 = dma.done [#allocation5], 1024
    $region29: #{sparse_scorenet_forward.1} parent=1 // pred_fallthru
      _
    %v48 = vld [vmem:[%s0] sm:$0xff]
    %v49 = vld [vmem:[%s4] sm:$0xff]
    %v50 = vld [vmem:[%s1] sm:$0xf]
    %v51 = vlaneseq
    %v52 = vshrl.u32 %v51, 7
    %v53 = vsub.s32 0, %v52
    %v54 = vrot.slane %v49, %v53
    %vm55 = vcmask 31744
    %v57 = vsel %vm55, %v48, 0
    %vm59 = vcmask 1043456
    %v61 = vsel %vm59, %v50, 0
    %63 = vmatprep.subr.mxu0 0.0
    %64 = vmatpush1.msra.mxu0 %v61
    %65 = vmatprep.subr.mxu0 0.0
    %66 = vmatpush1.msra.mxu0 0.0
    %67 = vmatprep.subr.mxu0 0.0
    %68 = vmatpush1.msra.mxu0 0.0
    %69 = vmatprep.subr.mxu0 0.0
    %70 = vmatpush1.msra.mxu0 0.0
    %71 = vmatprep.subr.mxu0 0.0
    %72 = vmatpush1.msra.mxu0 0.0
    %73 = vmatprep.subr.mxu0 0.0
    %74 = vmatpush1.msra.mxu0 0.0
    %75 = vmatprep.subr.mxu0 0.0
    %76 = vmatpush1.msra.mxu0 0.0
    %77 = vmatprep.subr.mxu0 0.0
    %78 = vmatpush1.msra.mxu0 0.0
    %79 = vmatprep.subr.mxu0 0.0
    %80 = vmatpush1.msra.mxu0 0.0
    %81 = vmatprep.subr.mxu0 0.0
    %82 = vmatpush1.msra.mxu0 0.0
    %83 = vmatprep.subr.mxu0 0.0
    %84 = vmatpush1.msra.mxu0 0.0
    %85 = vmatprep.subr.mxu0 0.0
    %86 = vmatpush1.msra.mxu0 0.0
    %87 = vmatprep.subr.mxu0 0.0
    %88 = vmatpush1.msra.mxu0 0.0
    %89 = vmatprep.subr.mxu0 0.0
    %90 = vmatpush1.msra.mxu0 0.0
    %91 = vmatprep.subr.mxu0 0.0
    %92 = vmatpush1.msra.mxu0 0.0
    %93 = vmatprep.subr.mxu0 0.0
    %94 = vmatpush1.msra.mxu0 0.0
    %95 = vmatprep.subr.mxu0 0.0
    %96 = vmatpush1.msra.mxu0 0.0
    %97 = vmatprep.subr.mxu0 0.0
    %98 = vmatpush1.msra.mxu0 0.0
    %99 = vmatprep.subr.mxu0 0.0
    %100 = vmatpush1.msra.mxu0 0.0
    %101 = vmatprep.subr.mxu0 0.0
    %102 = vmatpush1.msra.mxu0 0.0
    %103 = vmatprep.subr.mxu0 0.0
    %104 = vmatpush1.msra.mxu0 0.0
    %105 = vmatprep.subr.mxu0 0.0
    %106 = vmatpush1.msra.mxu0 0.0
    %107 = vmatprep.subr.mxu0 0.0
    %108 = vmatpush1.msra.mxu0 0.0
    %109 = vmatprep.subr.mxu0 0.0
    %110 = vmatpush1.msra.mxu0 0.0
    %111 = vmatprep.subr.mxu0 0.0
    %112 = vmatpush1.msra.mxu0 0.0
    %113 = vmatprep.subr.mxu0 0.0
    %114 = vmatpush1.msra.mxu0 0.0
    %115 = vmatprep.subr.mxu0 0.0
    %116 = vmatpush1.msra.mxu0 0.0
    %117 = vmatprep.subr.mxu0 0.0
    %118 = vmatpush1.msra.mxu0 0.0
    %119 = vmatprep.subr.mxu0 0.0
    %120 = vmatpush1.msra.mxu0 0.0
    %121 = vmatprep.subr.mxu0 0.0
    %122 = vmatpush1.msra.mxu0 0.0
    %123 = vmatprep.subr.mxu0 0.0
    %124 = vmatpush1.msra.mxu0 0.0
    %125 = vmatprep.subr.mxu0 0.0
    %126 = vmatpush1.msra.mxu0 0.0
    %127 = vmatprep.mubr.f32.mxu0 0.0
    %128 = vmatmul.mubr.f32.gmra.mrb[0].mxu0 %v57
    %v129 = vpop.f32.mrb[0].mxu0
    %v130 = vadd.f32 %v54, %v129
    %v131 = vpop.f32.mrb[0].mxu0
    %132 = vdwg.mxu0
    %vm133 = vcmask 261120
    %v134 = vsel %vm133, %v130, 0.0
    %135 = vadd.xlane.f32.xlu0 %v134
    %v136 = vpop.xlane.xlu0 %135
    %v137 = vrcp.pop 32.0
    %v138 = vmul.f32 %v136, %v137
    %v139 = vsub.f32 %v130, %v138
    %v140 = vmul.f32 %v139, %v139
    %v141 = vsel %vm133, %v140, 0.0
    %142 = vadd.xlane.f32.xlu0 %v141
    %v143 = vpop.xlane.xlu0 %142
    %v144 = vmul.f32 %v143, %v137
    %v145 = vadd.f32 %v144, 1e-05
    %v146 = vrsqrt.pop %v145
    %v147 = vmul.f32 %v139, %v146
    %v148 = vlaneseq
    %v149 = vshrl.u32 %v148, 7
    %v150 = vsub.s32 1, %v149
    %v151 = vrot.slane %v49, %v150
    %v152 = vmul.f32 %v147, %v151
    %v153 = vlaneseq
    %v154 = vshrl.u32 %v153, 7
    %v155 = vsub.s32 2, %v154
    %v156 = vrot.slane %v49, %v155
    %v157 = vadd.f32 %v152, %v156
    %v158 = vmax.f32 %v157, 0.0
    %160 = vrot.lane.b32.xlu0 %v130, 96
    %v161 = vpop.permute.xlu0 %160
    %v163 = vsel %vm133, %v161, 0.0
    %164 = vadd.xlane.f32.xlu0 %v163
    %v165 = vpop.xlane.xlu0 %164
    %v166 = vmul.f32 %v165, %v137
    %v167 = vsub.f32 %v130, %v166
    %v168 = vmul.f32 %v167, %v167
    %170 = vrot.lane.b32.xlu0 %v168, 96
    %v171 = vpop.permute.xlu0 %170
    %v173 = vsel %vm133, %v171, 0.0
    %174 = vadd.xlane.f32.xlu0 %v173
    %v175 = vpop.xlane.xlu0 %174
    %v176 = vmul.f32 %v175, %v137
    %v177 = vadd.f32 %v176, 1e-05
    %v178 = vrsqrt.pop %v177
    %v179 = vmul.f32 %v167, %v178
    %v180 = vmul.f32 %v179, %v151
    %v181 = vadd.f32 %v180, %v156
    %v182 = vmax.f32 %v181, 0.0
    %v183 = vld [vmem:[#allocation2] sm:$0xff]
    %v184 = vld [vmem:[#allocation2 + $0x8] sm:$0xff]
    %v185 = vld [vmem:[#allocation2 + $0x10] sm:$0xff]
    %v186 = vld [vmem:[#allocation2 + $0x18] sm:$0xff]
    %v187 = vlaneseq
    %v188 = vshrl.u32 %v187, 7
    %v189 = vsub.s32 3, %v188
    %v190 = vrot.slane %v49, %v189
    %v192 = vsel %vm133, %v158, 0
    %194 = vmatprep.subr.mxu0 0.0
    %195 = vmatpush1.msra.mxu0 %v183
    %196 = vmatprep.subr.mxu0 0.0
    %197 = vmatpush1.msra.mxu0 %v184
    %198 = vmatprep.subr.mxu0 0.0
    %199 = vmatpush1.msra.mxu0 %v185
    %200 = vmatprep.subr.mxu0 0.0
    %201 = vmatpush1.msra.mxu0 %v186
    %202 = vmatprep.subr.mxu0 0.0
    %203 = vmatpush1.msra.mxu0 0.0
    %204 = vmatprep.subr.mxu0 0.0
    %205 = vmatpush1.msra.mxu0 0.0
    %206 = vmatprep.subr.mxu0 0.0
    %207 = vmatpush1.msra.mxu0 0.0
    %208 = vmatprep.subr.mxu0 0.0
    %209 = vmatpush1.msra.mxu0 0.0
    %210 = vmatprep.subr.mxu0 0.0
    %211 = vmatpush1.msra.mxu0 0.0
    %212 = vmatprep.subr.mxu0 0.0
    %213 = vmatpush1.msra.mxu0 0.0
    %214 = vmatprep.subr.mxu0 0.0
    %215 = vmatpush1.msra.mxu0 0.0
    %216 = vmatprep.subr.mxu0 0.0
    %217 = vmatpush1.msra.mxu0 0.0
    %218 = vmatprep.subr.mxu0 0.0
    %219 = vmatpush1.msra.mxu0 0.0
    %220 = vmatprep.subr.mxu0 0.0
    %221 = vmatpush1.msra.mxu0 0.0
    %222 = vmatprep.subr.mxu0 0.0
    %223 = vmatpush1.msra.mxu0 0.0
    %224 = vmatprep.subr.mxu0 0.0
    %225 = vmatpush1.msra.mxu0 0.0
    %226 = vmatprep.subr.mxu0 0.0
    %227 = vmatpush1.msra.mxu0 0.0
    %228 = vmatprep.subr.mxu0 0.0
    %229 = vmatpush1.msra.mxu0 0.0
    %230 = vmatprep.subr.mxu0 0.0
    %231 = vmatpush1.msra.mxu0 0.0
    %232 = vmatprep.subr.mxu0 0.0
    %233 = vmatpush1.msra.mxu0 0.0
    %234 = vmatprep.subr.mxu0 0.0
    %235 = vmatpush1.msra.mxu0 0.0
    %236 = vmatprep.subr.mxu0 0.0
    %237 = vmatpush1.msra.mxu0 0.0
    %238 = vmatprep.subr.mxu0 0.0
    %239 = vmatpush1.msra.mxu0 0.0
    %240 = vmatprep.subr.mxu0 0.0
    %241 = vmatpush1.msra.mxu0 0.0
    %242 = vmatprep.subr.mxu0 0.0
    %243 = vmatpush1.msra.mxu0 0.0
    %244 = vmatprep.subr.mxu0 0.0
    %245 = vmatpush1.msra.mxu0 0.0
    %246 = vmatprep.subr.mxu0 0.0
    %247 = vmatpush1.msra.mxu0 0.0
    %248 = vmatprep.subr.mxu0 0.0
    %249 = vmatpush1.msra.mxu0 0.0
    %250 = vmatprep.subr.mxu0 0.0
    %251 = vmatpush1.msra.mxu0 0.0
    %252 = vmatprep.subr.mxu0 0.0
    %253 = vmatpush1.msra.mxu0 0.0
    %254 = vmatprep.subr.mxu0 0.0
    %255 = vmatpush1.msra.mxu0 0.0
    %256 = vmatprep.subr.mxu0 0.0
    %257 = vmatpush1.msra.mxu0 0.0
    %258 = vmatprep.mubr.f32.mxu0 0.0
    %259 = vmatmul.mubr.f32.gmra.mrb[0].mxu0 %v192
    %v260 = vpop.f32.mrb[0].mxu0
    %v261 = vadd.f32 %v190, %v260
    %v262 = vpop.f32.mrb[0].mxu0
    %263 = vdwg.mxu0
    %v264 = vsel %vm133, %v261, 0.0
    %265 = vadd.xlane.f32.xlu0 %v264
    %v266 = vpop.xlane.xlu0 %265
    %v267 = vmul.f32 %v266, %v137
    %v268 = vsub.f32 %v261, %v267
    %v269 = vmul.f32 %v268, %v268
    %v270 = vsel %vm133, %v269, 0.0
    %271 = vadd.xlane.f32.xlu0 %v270
    %v272 = vpop.xlane.xlu0 %271
    %v273 = vmul.f32 %v272, %v137
    %v274 = vadd.f32 %v273, 1e-05
    %v275 = vrsqrt.pop %v274
    %v276 = vmul.f32 %v268, %v275
    %v277 = vlaneseq
    %v278 = vshrl.u32 %v277, 7
    %v279 = vsub.s32 4, %v278
    %v280 = vrot.slane %v49, %v279
    %v281 = vmul.f32 %v276, %v280
    %v282 = vlaneseq
    %v283 = vshrl.u32 %v282, 7
    %v284 = vsub.s32 5, %v283
    %v285 = vrot.slane %v49, %v284
    %v286 = vadd.f32 %v281, %v285
    %v287 = vmax.f32 %v286, 0.0
    %v288 = vsel %vm133, %v287, %v182
    %v289 = vld [vmem:[#allocation4] sm:$0xff]
    %v290 = vld [vmem:[#allocation4 + $0x8] sm:$0xff]
    %v291 = vld [vmem:[#allocation4 + $0x10] sm:$0xff]
    %v292 = vld [vmem:[#allocation4 + $0x18] sm:$0xff]
    %v293 = vld [vmem:[#allocation4 + $0x20] sm:$0xff]
    %v294 = vld [vmem:[#allocation4 + $0x28] sm:$0xff]
    %v295 = vld [vmem:[#allocation4 + $0x30] sm:$0xff]
    %v296 = vld [vmem:[#allocation4 + $0x38] sm:$0xff]
    %v297 = vlaneseq
    %v298 = vshrl.u32 %v297, 7
    %v299 = vsub.s32 6, %v298
    %v300 = vrot.slane %v49, %v299
    %vm301 = vcmask 523264
    %v303 = vsel %vm301, %v288, 0
    %305 = vmatprep.subr.mxu0 0.0
    %306 = vmatpush1.msra.mxu0 %v289
    %307 = vmatprep.subr.mxu0 0.0
    %308 = vmatpush1.msra.mxu0 %v290
    %309 = vmatprep.subr.mxu0 0.0
    %310 = vmatpush1.msra.mxu0 %v291
    %311 = vmatprep.subr.mxu0 0.0
    %312 = vmatpush1.msra.mxu0 %v292
    %313 = vmatprep.subr.mxu0 0.0
    %314 = vmatpush1.msra.mxu0 %v293
    %315 = vmatprep.subr.mxu0 0.0
    %316 = vmatpush1.msra.mxu0 %v294
    %317 = vmatprep.subr.mxu0 0.0
    %318 = vmatpush1.msra.mxu0 %v295
    %319 = vmatprep.subr.mxu0 0.0
    %320 = vmatpush1.msra.mxu0 %v296
    %321 = vmatprep.subr.mxu0 0.0
    %322 = vmatpush1.msra.mxu0 0.0
    %323 = vmatprep.subr.mxu0 0.0
    %324 = vmatpush1.msra.mxu0 0.0
    %325 = vmatprep.subr.mxu0 0.0
    %326 = vmatpush1.msra.mxu0 0.0
    %327 = vmatprep.subr.mxu0 0.0
    %328 = vmatpush1.msra.mxu0 0.0
    %329 = vmatprep.subr.mxu0 0.0
    %330 = vmatpush1.msra.mxu0 0.0
    %331 = vmatprep.subr.mxu0 0.0
    %332 = vmatpush1.msra.mxu0 0.0
    %333 = vmatprep.subr.mxu0 0.0
    %334 = vmatpush1.msra.mxu0 0.0
    %335 = vmatprep.subr.mxu0 0.0
    %336 = vmatpush1.msra.mxu0 0.0
    %337 = vmatprep.subr.mxu0 0.0
    %338 = vmatpush1.msra.mxu0 0.0
    %339 = vmatprep.subr.mxu0 0.0
    %340 = vmatpush1.msra.mxu0 0.0
    %341 = vmatprep.subr.mxu0 0.0
    %342 = vmatpush1.msra.mxu0 0.0
    %343 = vmatprep.subr.mxu0 0.0
    %344 = vmatpush1.msra.mxu0 0.0
    %345 = vmatprep.subr.mxu0 0.0
    %346 = vmatpush1.msra.mxu0 0.0
    %347 = vmatprep.subr.mxu0 0.0
    %348 = vmatpush1.msra.mxu0 0.0
    %349 = vmatprep.subr.mxu0 0.0
    %350 = vmatpush1.msra.mxu0 0.0
    %351 = vmatprep.subr.mxu0 0.0
    %352 = vmatpush1.msra.mxu0 0.0
    %353 = vmatprep.subr.mxu0 0.0
    %354 = vmatpush1.msra.mxu0 0.0
    %355 = vmatprep.subr.mxu0 0.0
    %356 = vmatpush1.msra.mxu0 0.0
    %357 = vmatprep.subr.mxu0 0.0
    %358 = vmatpush1.msra.mxu0 0.0
    %359 = vmatprep.subr.mxu0 0.0
    %360 = vmatpush1.msra.mxu0 0.0
    %361 = vmatprep.subr.mxu0 0.0
    %362 = vmatpush1.msra.mxu0 0.0
    %363 = vmatprep.subr.mxu0 0.0
    %364 = vmatpush1.msra.mxu0 0.0
    %365 = vmatprep.subr.mxu0 0.0
    %366 = vmatpush1.msra.mxu0 0.0
    %367 = vmatprep.subr.mxu0 0.0
    %368 = vmatpush1.msra.mxu0 0.0
    %369 = vmatprep.mubr.f32.mxu0 0.0
    %370 = vmatmul.mubr.f32.gmra.mrb[0].mxu0 %v303
    %v371 = vpop.f32.mrb[0].mxu0
    %v372 = vadd.f32 %v300, %v371
    %v373 = vpop.f32.mrb[0].mxu0
    %374 = vdwg.mxu0
    %v375 = vlaneseq
    %v376 = vand.u32 %v375, 127
    %v377 = vmax.f32 %v372, 0.0
    %v378 = vand.u32 2147483647, %v372
    %v379 = vsub.f32 0.0, %v378
    %v380 = vmul.f32 %v379, 1.442695
    %v381 = vpow.pop %v380
    %v382 = vadd.f32 %v381, 1.0
    %v383 = vlog2.pop %v382
    %v384 = vmul.f32 %v383, 0.6931472
    %v385 = vadd.f32 %v377, %v384
    %vm386 = vcmp.eq.s32.totalorder %v376, 4
    %v387 = vsel %vm386, %v385, %v372
    %388 = vst [vmem:[%s5] sm:$0xff] %v387
    // Predicated region
    $region30: #{sparse_scorenet_forward.1} parent=1 // pred_check
      _
    $region31: #{sparse_scorenet_forward.1} parent=1 // pred_check_branch
      %390 = sbr.rel (0) target = $region33
    $region32: #{sparse_scorenet_forward.1} parent=1 // pred_region
      _
    $region33: #{sparse_scorenet_forward.1} parent=1 // pred_fallthru
      _
    // Predicated region
    $region34: #{sparse_scorenet_forward.1} parent=1 // pred_check
      _
    $region35: #{sparse_scorenet_forward.1} parent=1 // pred_check_branch
      %392 = sbr.rel (0) target = $region37
    $region36: #{sparse_scorenet_forward.1} parent=1 // pred_region
      _
    $region37: #{sparse_scorenet_forward.1} parent=1 // pred_fallthru
      _
    %393 = vsyncpa [#allocation3], 1
    %394 = vsyncpa [#allocation5], 1

</llo_original>
